<compile_context>
chip_gen: v6e
topology: v6e:2x2x1
jax: 0.10.0
libtpu: 0.0.40
codegen_flags: <defaults>
</compile_context>

<pallas_src>
import functools

import jax
import jax.numpy as jnp
import numpy as np
from jax.experimental import pallas as pl
from jax.experimental.pallas import tpu as pltpu


def _critic_kernel(
    s_ref, c_ref, a_ref,                       # batch tiles
    w1s_ref, w1c_ref, w1a_ref, b1_ref,         # fused layer 1 (row-split W1)
    w2_ref, b2_ref,                            # fused layer 2 (block-diagonal)
    w3_ref, b3_ref,                            # fused layer 3 (block-diagonal)
    out_ref,                                   # (TB, 2): [:, 0] = Q1, [:, 1] = Q2
):
    s = s_ref[...].astype(jnp.bfloat16)
    c = c_ref[...].astype(jnp.bfloat16)
    a = a_ref[...].astype(jnp.bfloat16)

    # layer 1: x @ W1 computed as three row-split matmuls (no concat of x needed)
    h = (jnp.dot(s, w1s_ref[...], preferred_element_type=jnp.float32)
         + jnp.dot(c, w1c_ref[...], preferred_element_type=jnp.float32)
         + jnp.dot(a, w1a_ref[...], preferred_element_type=jnp.float32)
         + b1_ref[...])
    h = jnp.maximum(h, 0.0).astype(jnp.bfloat16)

    # layer 2: both heads at once via block-diagonal weight
    h = jnp.dot(h, w2_ref[...], preferred_element_type=jnp.float32) + b2_ref[...]
    h = jnp.maximum(h, 0.0).astype(jnp.bfloat16)

    # layer 3: both heads -> packed (TB, 2) output
    out_ref[...] = (
        jnp.dot(h, w3_ref[...], preferred_element_type=jnp.float32) + b3_ref[...]
    )


def fuse_critic_params(params, obs_dim, cd_dim):
    """Fuse Q1/Q2 heads into one packed parameter set (done once, not per forward)."""
    p1, p2 = params["q1"], params["q2"]
    H1 = p1["w1"].shape[1]
    H2 = p1["w2"].shape[1]
    f32, bf16 = jnp.float32, jnp.bfloat16

    w1f = jnp.concatenate([p1["w1"], p2["w1"]], axis=1)              # (D, 2*H1)
    z12 = jnp.zeros((H1, H2), f32)
    w2f = jnp.block([[p1["w2"], z12], [z12, p2["w2"]]])              # (2*H1, 2*H2)
    z3 = jnp.zeros((H2, 1), f32)
    w3f = jnp.block([[p1["w3"], z3], [z3, p2["w3"]]])                # (2*H2, 2)

    return {
        "w1s": w1f[:obs_dim].astype(bf16),
        "w1c": w1f[obs_dim:obs_dim + cd_dim].astype(bf16),
        "w1a": w1f[obs_dim + cd_dim:].astype(bf16),
        "b1": jnp.concatenate([p1["b1"], p2["b1"]], axis=1).astype(f32),
        "w2": w2f.astype(bf16),
        "b2": jnp.concatenate([p1["b2"], p2["b2"]], axis=1).astype(f32),
        "w3": w3f.astype(bf16),
        "b3": jnp.concatenate([p1["b3"], p2["b3"]], axis=1).astype(f32),
    }


def _round_up(n, m):
    return ((n + m - 1) // m) * m


@functools.partial(jax.jit, static_argnames=("block_b",))
def critic_forward(states, inv_countdowns, actions, fused, *, block_b=512):
    """Pallas equivalent of Critic.forward. Returns (q1, q2), each (B, 1) f32."""
    B = states.shape[0]
    obs_dim = states.shape[1]
    cd_dim = inv_countdowns.shape[1]
    act_dim = actions.shape[1]

    # Large batch tile (multiple of 8 sublanes; multiple of 256 when batch allows),
    # never larger than the (padded) batch itself.
    TB = min(block_b, _round_up(B, 8))
    Bp = _round_up(B, TB)
    if Bp != B:
        pad = ((0, Bp - B), (0, 0))
        states = jnp.pad(states, pad)
        inv_countdowns = jnp.pad(inv_countdowns, pad)
        actions = jnp.pad(actions, pad)

    grid = (Bp // TB,)

    def batch_spec(d):
        return pl.BlockSpec((TB, d), lambda i: (i, 0))

    def resident_spec(arr):
        # full-array block, constant index_map -> stays VMEM-resident across steps
        return pl.BlockSpec(arr.shape, lambda i: (0, 0))

    param_order = ("w1s", "w1c", "w1a", "b1", "w2", "b2", "w3", "b3")
    param_args = [fused[k] for k in param_order]

    out = pl.pallas_call(
        _critic_kernel,
        out_shape=jax.ShapeDtypeStruct((Bp, 2), jnp.float32),
        grid=grid,
        in_specs=[batch_spec(obs_dim), batch_spec(cd_dim), batch_spec(act_dim)]
                 + [resident_spec(p) for p in param_args],
        out_specs=pl.BlockSpec((TB, 2), lambda i: (i, 0)),
        compiler_params=pltpu.CompilerParams(dimension_semantics=("parallel",)),
    )(states, inv_countdowns, actions, *param_args)

    q1 = out[:B, 0:1]
    q2 = out[:B, 1:2]
    return q1, q2


def init_critic_params(key, state_dim, action_dim, hidden_dim):
    """Deterministic init mimicking nn.Linear default (U[-1/sqrt(fan_in), 1/sqrt(fan_in)])."""
    in_dim = state_dim + action_dim
    dims = [in_dim, hidden_dim[0], hidden_dim[1], 1]

    def init_head(key):
        p = {}
        for i in range(3):
            key, kw, kb = jax.random.split(key, 3)
            fan_in = dims[i]
            bound = 1.0 / np.sqrt(fan_in)
            # stored as (in, out) so the kernel does x @ w (equivalent to torch's x @ W.T)
            p[f"w{i+1}"] = jax.random.uniform(
                kw, (dims[i], dims[i + 1]), jnp.float32, -bound, bound)
            p[f"b{i+1}"] = jax.random.uniform(
                kb, (1, dims[i + 1]), jnp.float32, -bound, bound)
        return p, key

    q1, key = init_head(key)
    q2, key = init_head(key)
    return {"q1": q1, "q2": q2}


if __name__ == "__main__":
    # Small, self-consistent shapes:
    #   states: (B, 6), inv_countdowns: (B, 2)  -> together state_dim = 8
    #   actions: (B, 4)                          -> action_dim = 4
    #   hidden_dim = [32, 32]
    B = 8
    obs_dim, cd_dim, action_dim = 6, 2, 4
    state_dim = obs_dim + cd_dim
    hidden_dim = [32, 32]

    key = jax.random.PRNGKey(0)
    key, k_s, k_c, k_a, k_p = jax.random.split(key, 5)
    states = jax.random.normal(k_s, (B, obs_dim), jnp.float32)
    inv_countdowns = jax.random.uniform(k_c, (B, cd_dim), jnp.float32)
    actions = jax.random.normal(k_a, (B, action_dim), jnp.float32)

    params = init_critic_params(k_p, state_dim, action_dim, hidden_dim)
    fused = fuse_critic_params(params, obs_dim, cd_dim)

    q1, q2 = critic_forward(states, inv_countdowns, actions, fused)
    jax.block_until_ready((q1, q2))

    # Pure-JAX f32 reference check of the forward pass
    x = jnp.concatenate([states, inv_countdowns, actions], axis=1)

    def ref_mlp(x, p):
        h = jnp.maximum(x @ p["w1"] + p["b1"], 0.0)
        h = jnp.maximum(h @ p["w2"] + p["b2"], 0.0)
        return h @ p["w3"] + p["b3"]

    # bf16 matmul operands (f32 accumulation) -> loosened tolerance vs f32 reference
    np.testing.assert_allclose(np.asarray(q1), np.asarray(ref_mlp(x, params["q1"])),
                               rtol=5e-2, atol=5e-2)
    np.testing.assert_allclose(np.asarray(q2), np.asarray(ref_mlp(x, params["q2"])),
                               rtol=5e-2, atol=5e-2)

    assert q1.shape == (B, 1) and q2.shape == (B, 1)
    print("KERNEL_OK")
</pallas_src>

<mosaic_0001>
module attributes {stable_mosaic.version = 11 : i64} {
  func.func @_critic_kernel(%arg0: i32, %arg1: memref<8x6xf32, #tpu.memory_space<vmem>>, %arg2: memref<8x2xf32, #tpu.memory_space<vmem>>, %arg3: memref<8x4xf32, #tpu.memory_space<vmem>>, %arg4: memref<6x64xbf16, #tpu.memory_space<vmem>>, %arg5: memref<2x64xbf16, #tpu.memory_space<vmem>>, %arg6: memref<4x64xbf16, #tpu.memory_space<vmem>>, %arg7: memref<1x64xf32, #tpu.memory_space<vmem>>, %arg8: memref<64x64xbf16, #tpu.memory_space<vmem>>, %arg9: memref<1x64xf32, #tpu.memory_space<vmem>>, %arg10: memref<64x2xbf16, #tpu.memory_space<vmem>>, %arg11: memref<1x2xf32, #tpu.memory_space<vmem>>, %arg12: memref<8x2xf32, #tpu.memory_space<vmem>>) attributes {dimension_semantics = [#tpu.dimension_semantics<parallel>], iteration_bounds = array<i64: 1>, scalar_prefetch = 0 : i64, scratch_operands = 0 : i64, tpu.core_type = #tpu.core_type<tc>, window_params = [{transform_indices = @transform_0, window_bounds = array<i64: 8, 6>}, {transform_indices = @transform_1, window_bounds = array<i64: 8, 2>}, {transform_indices = @transform_2, window_bounds = array<i64: 8, 4>}, {pipeline_mode = #tpu.pipeline_mode<synchronous>, transform_indices = @transform_3, window_bounds = array<i64: 6, 64>}, {pipeline_mode = #tpu.pipeline_mode<synchronous>, transform_indices = @transform_4, window_bounds = array<i64: 2, 64>}, {pipeline_mode = #tpu.pipeline_mode<synchronous>, transform_indices = @transform_5, window_bounds = array<i64: 4, 64>}, {pipeline_mode = #tpu.pipeline_mode<synchronous>, transform_indices = @transform_6, window_bounds = array<i64: 1, 64>}, {pipeline_mode = #tpu.pipeline_mode<synchronous>, transform_indices = @transform_7, window_bounds = array<i64: 64, 64>}, {pipeline_mode = #tpu.pipeline_mode<synchronous>, transform_indices = @transform_8, window_bounds = array<i64: 1, 64>}, {pipeline_mode = #tpu.pipeline_mode<synchronous>, transform_indices = @transform_9, window_bounds = array<i64: 64, 2>}, {pipeline_mode = #tpu.pipeline_mode<synchronous>, transform_indices = @transform_10, window_bounds = array<i64: 1, 2>}, {transform_indices = @transform_11, window_bounds = array<i64: 8, 2>}]} {
    %c0 = arith.constant 0 : index
    %c0_0 = arith.constant 0 : index
    %0 = vector.load %arg1[%c0, %c0_0] : memref<8x6xf32, #tpu.memory_space<vmem>>, vector<8x6xf32>
    %1 = arith.truncf %0 : vector<8x6xf32> to vector<8x6xbf16>
    %c0_1 = arith.constant 0 : index
    %c0_2 = arith.constant 0 : index
    %2 = vector.load %arg2[%c0_1, %c0_2] : memref<8x2xf32, #tpu.memory_space<vmem>>, vector<8x2xf32>
    %3 = arith.truncf %2 : vector<8x2xf32> to vector<8x2xbf16>
    %c0_3 = arith.constant 0 : index
    %c0_4 = arith.constant 0 : index
    %4 = vector.load %arg3[%c0_3, %c0_4] : memref<8x4xf32, #tpu.memory_space<vmem>>, vector<8x4xf32>
    %5 = arith.truncf %4 : vector<8x4xf32> to vector<8x4xbf16>
    %c0_5 = arith.constant 0 : index
    %c0_6 = arith.constant 0 : index
    %6 = vector.load %arg4[%c0_5, %c0_6] : memref<6x64xbf16, #tpu.memory_space<vmem>>, vector<6x64xbf16>
    %cst = arith.constant dense<0.000000e+00> : vector<8x64xf32>
    %7 = tpu.matmul %1, %6, %cst {dimension_numbers = #tpu.dot_dimension_numbers<[1], [0], [0], [1], [0, 0, 1, 1], [], []>} : vector<8x6xbf16>, vector<6x64xbf16>, vector<8x64xf32> -> vector<8x64xf32>
    %c0_7 = arith.constant 0 : index
    %c0_8 = arith.constant 0 : index
    %8 = vector.load %arg5[%c0_7, %c0_8] : memref<2x64xbf16, #tpu.memory_space<vmem>>, vector<2x64xbf16>
    %cst_9 = arith.constant dense<0.000000e+00> : vector<8x64xf32>
    %9 = tpu.matmul %3, %8, %cst_9 {dimension_numbers = #tpu.dot_dimension_numbers<[1], [0], [0], [1], [0, 0, 1, 1], [], []>} : vector<8x2xbf16>, vector<2x64xbf16>, vector<8x64xf32> -> vector<8x64xf32>
    %10 = arith.addf %7, %9 : vector<8x64xf32>
    %c0_10 = arith.constant 0 : index
    %c0_11 = arith.constant 0 : index
    %11 = vector.load %arg6[%c0_10, %c0_11] : memref<4x64xbf16, #tpu.memory_space<vmem>>, vector<4x64xbf16>
    %cst_12 = arith.constant dense<0.000000e+00> : vector<8x64xf32>
    %12 = tpu.matmul %5, %11, %cst_12 {dimension_numbers = #tpu.dot_dimension_numbers<[1], [0], [0], [1], [0, 0, 1, 1], [], []>} : vector<8x4xbf16>, vector<4x64xbf16>, vector<8x64xf32> -> vector<8x64xf32>
    %13 = arith.addf %10, %12 : vector<8x64xf32>
    %c0_13 = arith.constant 0 : index
    %c0_14 = arith.constant 0 : index
    %14 = vector.load %arg7[%c0_13, %c0_14] : memref<1x64xf32, #tpu.memory_space<vmem>>, vector<1x64xf32>
    %15 = vector.broadcast %14 : vector<1x64xf32> to vector<8x64xf32>
    %16 = arith.addf %13, %15 : vector<8x64xf32>
    %cst_15 = arith.constant 0.000000e+00 : f32
    %17 = vector.broadcast %cst_15 : f32 to vector<8x64xf32>
    %18 = arith.maximumf %16, %17 : vector<8x64xf32>
    %19 = arith.truncf %18 : vector<8x64xf32> to vector<8x64xbf16>
    %c0_16 = arith.constant 0 : index
    %c0_17 = arith.constant 0 : index
    %20 = vector.load %arg8[%c0_16, %c0_17] : memref<64x64xbf16, #tpu.memory_space<vmem>>, vector<64x64xbf16>
    %cst_18 = arith.constant dense<0.000000e+00> : vector<8x64xf32>
    %21 = tpu.matmul %19, %20, %cst_18 {dimension_numbers = #tpu.dot_dimension_numbers<[1], [0], [0], [1], [0, 0, 1, 1], [], []>} : vector<8x64xbf16>, vector<64x64xbf16>, vector<8x64xf32> -> vector<8x64xf32>
    %c0_19 = arith.constant 0 : index
    %c0_20 = arith.constant 0 : index
    %22 = vector.load %arg9[%c0_19, %c0_20] : memref<1x64xf32, #tpu.memory_space<vmem>>, vector<1x64xf32>
    %23 = vector.broadcast %22 : vector<1x64xf32> to vector<8x64xf32>
    %24 = arith.addf %21, %23 : vector<8x64xf32>
    %cst_21 = arith.constant 0.000000e+00 : f32
    %25 = vector.broadcast %cst_21 : f32 to vector<8x64xf32>
    %26 = arith.maximumf %24, %25 : vector<8x64xf32>
    %27 = arith.truncf %26 : vector<8x64xf32> to vector<8x64xbf16>
    %c0_22 = arith.constant 0 : index
    %c0_23 = arith.constant 0 : index
    %28 = vector.load %arg10[%c0_22, %c0_23] : memref<64x2xbf16, #tpu.memory_space<vmem>>, vector<64x2xbf16>
    %cst_24 = arith.constant dense<0.000000e+00> : vector<8x2xf32>
    %29 = tpu.matmul %27, %28, %cst_24 {dimension_numbers = #tpu.dot_dimension_numbers<[1], [0], [0], [1], [0, 0, 1, 1], [], []>} : vector<8x64xbf16>, vector<64x2xbf16>, vector<8x2xf32> -> vector<8x2xf32>
    %c0_25 = arith.constant 0 : index
    %c0_26 = arith.constant 0 : index
    %30 = vector.load %arg11[%c0_25, %c0_26] : memref<1x2xf32, #tpu.memory_space<vmem>>, vector<1x2xf32>
    %31 = vector.broadcast %30 : vector<1x2xf32> to vector<8x2xf32>
    %32 = arith.addf %29, %31 : vector<8x2xf32>
    %c0_27 = arith.constant 0 : index
    %c0_28 = arith.constant 0 : index
    %33 = vector.load %arg12[%c0_27, %c0_28] : memref<8x2xf32, #tpu.memory_space<vmem>>, vector<8x2xf32>
    tpu.vector_store %arg12[%c0_27, %c0_28], %32 {strides = array<i32>} : memref<8x2xf32, #tpu.memory_space<vmem>>, vector<8x2xf32>,
    return
  }
  func.func @transform_0(%arg0: i32) -> (i32, i32) {
    %c0_i32 = arith.constant 0 : i32
    %c0_i32_0 = arith.constant 0 : i32
    return %arg0, %c0_i32 : i32, i32
  }
  func.func @transform_1(%arg0: i32) -> (i32, i32) {
    %c0_i32 = arith.constant 0 : i32
    %c0_i32_0 = arith.constant 0 : i32
    return %arg0, %c0_i32 : i32, i32
  }
  func.func @transform_2(%arg0: i32) -> (i32, i32) {
    %c0_i32 = arith.constant 0 : i32
    %c0_i32_0 = arith.constant 0 : i32
    return %arg0, %c0_i32 : i32, i32
  }
  func.func @transform_3(%arg0: i32) -> (i32, i32) {
    %c0_i32 = arith.constant 0 : i32
    %c0_i32_0 = arith.constant 0 : i32
    %c0_i32_1 = arith.constant 0 : i32
    return %c0_i32, %c0_i32_0 : i32, i32
  }
  func.func @transform_4(%arg0: i32) -> (i32, i32) {
    %c0_i32 = arith.constant 0 : i32
    %c0_i32_0 = arith.constant 0 : i32
    %c0_i32_1 = arith.constant 0 : i32
    return %c0_i32, %c0_i32_0 : i32, i32
  }
  func.func @transform_5(%arg0: i32) -> (i32, i32) {
    %c0_i32 = arith.constant 0 : i32
    %c0_i32_0 = arith.constant 0 : i32
    %c0_i32_1 = arith.constant 0 : i32
    return %c0_i32, %c0_i32_0 : i32, i32
  }
  func.func @transform_6(%arg0: i32) -> (i32, i32) {
    %c0_i32 = arith.constant 0 : i32
    %c0_i32_0 = arith.constant 0 : i32
    %c0_i32_1 = arith.constant 0 : i32
    return %c0_i32, %c0_i32_0 : i32, i32
  }
  func.func @transform_7(%arg0: i32) -> (i32, i32) {
    %c0_i32 = arith.constant 0 : i32
    %c0_i32_0 = arith.constant 0 : i32
    %c0_i32_1 = arith.constant 0 : i32
    return %c0_i32, %c0_i32_0 : i32, i32
  }
  func.func @transform_8(%arg0: i32) -> (i32, i32) {
    %c0_i32 = arith.constant 0 : i32
    %c0_i32_0 = arith.constant 0 : i32
    %c0_i32_1 = arith.constant 0 : i32
    return %c0_i32, %c0_i32_0 : i32, i32
  }
  func.func @transform_9(%arg0: i32) -> (i32, i32) {
    %c0_i32 = arith.constant 0 : i32
    %c0_i32_0 = arith.constant 0 : i32
    %c0_i32_1 = arith.constant 0 : i32
    return %c0_i32, %c0_i32_0 : i32, i32
  }
  func.func @transform_10(%arg0: i32) -> (i32, i32) {
    %c0_i32 = arith.constant 0 : i32
    %c0_i32_0 = arith.constant 0 : i32
    %c0_i32_1 = arith.constant 0 : i32
    return %c0_i32, %c0_i32_0 : i32, i32
  }
  func.func @transform_11(%arg0: i32) -> (i32, i32) {
    %c0_i32 = arith.constant 0 : i32
    %c0_i32_0 = arith.constant 0 : i32
    return %arg0, %c0_i32 : i32, i32
  }
}

</mosaic_0001>

<llo_original>
// kernel: critic_forward.1
$region0: #{critic_forward.1}
  #allocation0 [shape = 'u32[]', space=smem, size = 0x4, offset = 0x4, fixed_abs, tag = 'smem constant byte address 0x4 - core index']
  #allocation1 [shape = 'u32[144,128]{1,0:T(1,128)}', space=vmem, size = 0x12000, scoped, tag = 'internal scratch']
  %s0 = inlined_call_operand.vmem [shape: f32[8,6], index: 0, kind: input, shape index: {}]
  %s1 = inlined_call_operand.vmem [shape: f32[8,2], index: 1, kind: input, shape index: {}]
  %s2 = inlined_call_operand.vmem [shape: f32[8,4], index: 2, kind: input, shape index: {}]
  %s3 = inlined_call_operand.vmem [shape: bf16[6,64], index: 3, kind: input, shape index: {}]
  %s4 = inlined_call_operand.vmem [shape: bf16[2,64], index: 4, kind: input, shape index: {}]
  %s5 = inlined_call_operand.vmem [shape: bf16[4,64], index: 5, kind: input, shape index: {}]
  %s6 = inlined_call_operand.vmem [shape: f32[1,64], index: 6, kind: input, shape index: {}]
  %s7 = inlined_call_operand.vmem [shape: bf16[64,64], index: 7, kind: input, shape index: {}]
  %s8 = inlined_call_operand.vmem [shape: f32[1,64], index: 8, kind: input, shape index: {}]
  %s9 = inlined_call_operand.vmem [shape: bf16[64,2], index: 9, kind: input, shape index: {}]
  %s10 = inlined_call_operand.vmem [shape: f32[1,2], index: 10, kind: input, shape index: {}]
  %s11 = inlined_call_operand.vmem [shape: f32[8,2], index: 11, kind: output, shape index: {}]
  %s12 = sld [smem:[#allocation0]]
  $region54: #{critic_forward.1} parent=0
    _
  %s14 = ssub.s32 1, %s12
  %s15 = scalar_select 0, %s14, %s12
  // Predicated region
  $region2: #{critic_forward.1} parent=0 // pred_check
    _
  $region3: #{critic_forward.1} parent=0 // pred_check_branch
    %17 = sbr.rel (0) target = $region5
  $region4: #{critic_forward.1} parent=0 // pred_region
    _
  $region5: #{critic_forward.1} parent=0 // pred_fallthru
    _
  // Predicated region
  $region6: #{critic_forward.1} parent=0 // pred_check
    _
  $region7: #{critic_forward.1} parent=0 // pred_check_branch
    %19 = sbr.rel (0) target = $region9
  $region8: #{critic_forward.1} parent=0 // pred_region
    _
  $region9: #{critic_forward.1} parent=0 // pred_fallthru
    _
  // Predicated region
  $region10: #{critic_forward.1} parent=0 // pred_check
    _
  $region11: #{critic_forward.1} parent=0 // pred_check_branch
    %21 = sbr.rel (0) target = $region13
  $region12: #{critic_forward.1} parent=0 // pred_region
    _
  $region13: #{critic_forward.1} parent=0 // pred_fallthru
    _
  // Predicated region
  $region14: #{critic_forward.1} parent=0 // pred_check
    _
  $region15: #{critic_forward.1} parent=0 // pred_check_branch
    %23 = sbr.rel (0) target = $region17
  $region16: #{critic_forward.1} parent=0 // pred_region
    _
  $region17: #{critic_forward.1} parent=0 // pred_fallthru
    _
  // Predicated region
  $region18: #{critic_forward.1} parent=0 // pred_check
    _
  $region19: #{critic_forward.1} parent=0 // pred_check_branch
    %25 = sbr.rel (0) target = $region21
  $region20: #{critic_forward.1} parent=0 // pred_region
    _
  $region21: #{critic_forward.1} parent=0 // pred_fallthru
    _
  // Predicated region
  $region22: #{critic_forward.1} parent=0 // pred_check
    _
  $region23: #{critic_forward.1} parent=0 // pred_check_branch
    %27 = sbr.rel (0) target = $region25
  $region24: #{critic_forward.1} parent=0 // pred_region
    _
  $region25: #{critic_forward.1} parent=0 // pred_fallthru
    _
  // Predicated region
  $region26: #{critic_forward.1} parent=0 // pred_check
    _
  $region27: #{critic_forward.1} parent=0 // pred_check_branch
    %29 = sbr.rel (0) target = $region29
  $region28: #{critic_forward.1} parent=0 // pred_region
    _
  $region29: #{critic_forward.1} parent=0 // pred_fallthru
    _
  // Predicated region
  $region30: #{critic_forward.1} parent=0 // pred_check
    _
  $region31: #{critic_forward.1} parent=0 // pred_check_branch
    %31 = sbr.rel (0) target = $region33
  $region32: #{critic_forward.1} parent=0 // pred_region
    _
  $region33: #{critic_forward.1} parent=0 // pred_fallthru
    _
  // Predicated region
  $region34: #{critic_forward.1} parent=0 // pred_check
    _
  $region35: #{critic_forward.1} parent=0 // pred_check_branch
    %33 = sbr.rel (0) target = $region37
  $region36: #{critic_forward.1} parent=0 // pred_region
    _
  $region37: #{critic_forward.1} parent=0 // pred_fallthru
    _
  // Predicated region
  $region38: #{critic_forward.1} parent=0 // pred_check
    _
  $region39: #{critic_forward.1} parent=0 // pred_check_branch
    %35 = sbr.rel (0) target = $region41
  $region40: #{critic_forward.1} parent=0 // pred_region
    _
  $region41: #{critic_forward.1} parent=0 // pred_fallthru
    _
  // Predicated region
  $region42: #{critic_forward.1} parent=0 // pred_check
    _
  $region43: #{critic_forward.1} parent=0 // pred_check_branch
    %37 = sbr.rel (0) target = $region45
  $region44: #{critic_forward.1} parent=0 // pred_region
    _
  $region45: #{critic_forward.1} parent=0 // pred_fallthru
    _
  %v39 = vld [vmem:[%s0] sm:$0xff]
  %v40 = vpack.c.bf16 %v39, %v39
  %v41 = vld [vmem:[%s1] sm:$0xff]
  %v42 = vpack.c.bf16 %v41, %v41
  %v43 = vld [vmem:[%s2] sm:$0xff]
  %v44 = vpack.c.bf16 %v43, %v43
  %v45 = vld [vmem:[%s3] sm:$0x7]
  %v46 = vld [vmem:[%s4] sm:$0x1]
  %vm47 = vcmask 15360
  %v49 = vsel %vm47, %v42, 0
  %vm51 = vcmask 1040384
  %v53 = vsel %vm51, %v46, 0
  %55 = vmatprep.subr.bf16.mxu0 0
  %56 = vmatpush1.bf16.msra.mxu0 0
  %57 = vmatprep.subr.bf16.mxu0 0
  %58 = vmatpush1.bf16.msra.mxu0 0
  %59 = vmatprep.subr.bf16.mxu0 0
  %60 = vmatpush1.bf16.msra.mxu0 0
  %61 = vmatprep.subr.bf16.mxu0 0
  %62 = vmatpush1.bf16.msra.mxu0 0
  %63 = vmatprep.subr.bf16.mxu0 0
  %64 = vmatpush1.bf16.msra.mxu0 0
  %65 = vmatprep.subr.bf16.mxu0 0
  %66 = vmatpush1.bf16.msra.mxu0 0
  %67 = vmatprep.subr.bf16.mxu0 0
  %68 = vmatpush1.bf16.msra.mxu0 0
  %69 = vmatprep.subr.bf16.mxu0 0
  %70 = vmatpush1.bf16.msra.mxu0 %v53
  %71 = vmatprep.subr.bf16.mxu0 0
  %72 = vmatpush2.bf16.msra.mxu0 0
  %73 = vmatprep.subr.bf16.mxu0 0
  %74 = vmatpush2.bf16.msra.mxu0 0
  %75 = vmatprep.subr.bf16.mxu0 0
  %76 = vmatpush2.bf16.msra.mxu0 0
  %77 = vmatprep.subr.bf16.mxu0 0
  %78 = vmatpush2.bf16.msra.mxu0 0
  %79 = vmatprep.subr.bf16.mxu0 0
  %80 = vmatpush2.bf16.msra.mxu0 0
  %81 = vmatprep.subr.bf16.mxu0 0
  %82 = vmatpush2.bf16.msra.mxu0 0
  %83 = vmatprep.subr.bf16.mxu0 0
  %84 = vmatpush2.bf16.msra.mxu0 0
  %85 = vmatprep.subr.bf16.mxu0 0
  %86 = vmatpush2.bf16.msra.mxu0 0
  %87 = vmatprep.mubr.bf16.mxu0 0
  %88 = vmatmul.mubr.bf16.gmra.mxu0 %v49
  %v89 = vpop.f32.mrf.mxu0
  %v90 = vadd.f32 0.0, %v89
  %v91 = vpop.f32.mrf.mxu0
  %v92 = vpop.f32.mrf.mxu0
  %v93 = vpop.f32.mrf.mxu0
  %94 = vdwg.mxu0
  %vm95 = vcmask 48128
  %v97 = vsel %vm95, %v40, 0
  %vm99 = vcmask 1042432
  %v101 = vsel %vm99, %v45, 0
  %103 = vmatprep.subr.bf16.mxu0 0
  %104 = vmatpush1.bf16.msra.mxu0 0
  %105 = vmatprep.subr.bf16.mxu0 0
  %106 = vmatpush1.bf16.msra.mxu0 0
  %107 = vmatprep.subr.bf16.mxu0 0
  %108 = vmatpush1.bf16.msra.mxu0 0
  %109 = vmatprep.subr.bf16.mxu0 0
  %110 = vmatpush1.bf16.msra.mxu0 0
  %111 = vmatprep.subr.bf16.mxu0 0
  %112 = vmatpush1.bf16.msra.mxu0 0
  %113 = vmatprep.subr.bf16.mxu0 0
  %114 = vmatpush1.bf16.msra.mxu0 0
  %115 = vmatprep.subr.bf16.mxu0 0
  %116 = vmatpush1.bf16.msra.mxu0 0
  %117 = vmatprep.subr.bf16.mxu0 0
  %118 = vmatpush1.bf16.msra.mxu0 %v101
  %119 = vmatprep.subr.bf16.mxu0 0
  %120 = vmatpush2.bf16.msra.mxu0 0
  %121 = vmatprep.subr.bf16.mxu0 0
  %122 = vmatpush2.bf16.msra.mxu0 0
  %123 = vmatprep.subr.bf16.mxu0 0
  %124 = vmatpush2.bf16.msra.mxu0 0
  %125 = vmatprep.subr.bf16.mxu0 0
  %126 = vmatpush2.bf16.msra.mxu0 0
  %127 = vmatprep.subr.bf16.mxu0 0
  %128 = vmatpush2.bf16.msra.mxu0 0
  %129 = vmatprep.subr.bf16.mxu0 0
  %130 = vmatpush2.bf16.msra.mxu0 0
  %131 = vmatprep.subr.bf16.mxu0 0
  %132 = vmatpush2.bf16.msra.mxu0 0
  %133 = vmatprep.subr.bf16.mxu0 0
  %134 = vmatpush2.bf16.msra.mxu0 0
  %135 = vmatprep.mubr.bf16.mxu0 0
  %136 = vmatmul.mubr.bf16.gmra.mxu0 %v97
  %v137 = vpop.f32.mrf.mxu0
  %v138 = vadd.f32 %v90, %v137
  %v139 = vpop.f32.mrf.mxu0
  %v140 = vpop.f32.mrf.mxu0
  %v141 = vpop.f32.mrf.mxu0
  %142 = vdwg.mxu0
  %v143 = vld [vmem:[%s5] sm:$0x3]
  %vm144 = vcmask 31744
  %v146 = vsel %vm144, %v44, 0
  %vm148 = vcmask 1041408
  %v150 = vsel %vm148, %v143, 0
  %152 = vmatprep.subr.bf16.mxu0 0
  %153 = vmatpush1.bf16.msra.mxu0 0
  %154 = vmatprep.subr.bf16.mxu0 0
  %155 = vmatpush1.bf16.msra.mxu0 0
  %156 = vmatprep.subr.bf16.mxu0 0
  %157 = vmatpush1.bf16.msra.mxu0 0
  %158 = vmatprep.subr.bf16.mxu0 0
  %159 = vmatpush1.bf16.msra.mxu0 0
  %160 = vmatprep.subr.bf16.mxu0 0
  %161 = vmatpush1.bf16.msra.mxu0 0
  %162 = vmatprep.subr.bf16.mxu0 0
  %163 = vmatpush1.bf16.msra.mxu0 0
  %164 = vmatprep.subr.bf16.mxu0 0
  %165 = vmatpush1.bf16.msra.mxu0 0
  %166 = vmatprep.subr.bf16.mxu0 0
  %167 = vmatpush1.bf16.msra.mxu0 %v150
  %168 = vmatprep.subr.bf16.mxu0 0
  %169 = vmatpush2.bf16.msra.mxu0 0
  %170 = vmatprep.subr.bf16.mxu0 0
  %171 = vmatpush2.bf16.msra.mxu0 0
  %172 = vmatprep.subr.bf16.mxu0 0
  %173 = vmatpush2.bf16.msra.mxu0 0
  %174 = vmatprep.subr.bf16.mxu0 0
  %175 = vmatpush2.bf16.msra.mxu0 0
  %176 = vmatprep.subr.bf16.mxu0 0
  %177 = vmatpush2.bf16.msra.mxu0 0
  %178 = vmatprep.subr.bf16.mxu0 0
  %179 = vmatpush2.bf16.msra.mxu0 0
  %180 = vmatprep.subr.bf16.mxu0 0
  %181 = vmatpush2.bf16.msra.mxu0 0
  %182 = vmatprep.subr.bf16.mxu0 0
  %183 = vmatpush2.bf16.msra.mxu0 0
  %184 = vmatprep.mubr.bf16.mxu0 0
  %185 = vmatmul.mubr.bf16.gmra.mxu0 %v146
  %v186 = vpop.f32.mrf.mxu0
  %v187 = vadd.f32 0.0, %v186
  %v188 = vpop.f32.mrf.mxu0
  %v189 = vpop.f32.mrf.mxu0
  %v190 = vpop.f32.mrf.mxu0
  %191 = vdwg.mxu0
  %v192 = vadd.f32 %v138, %v187
  %v193 = vld [vmem:[%s6] sm:$0x1]
  %v195 = vlaneseq
  %v196 = vshrl.u32 %v195, 7
  %v197 = vsub.s32 0, %v196
  %v198 = vrot.slane %v193, %v197
  %v200 = vadd.f32 %v192, %v198
  %v201 = vmax.f32 %v200, 0.0
  %v202 = vpack.c.bf16 %v201, %v201
  %v203 = vld [vmem:[%s7] sm:$0xf]
  %v204 = vld [vmem:[%s7 + $0x4] sm:$0xf]
  %v205 = vld [vmem:[%s7 + $0x8] sm:$0xf]
  %v206 = vld [vmem:[%s7 + $0xc] sm:$0xf]
  %v207 = vld [vmem:[%s7 + $0x10] sm:$0xf]
  %v208 = vld [vmem:[%s7 + $0x14] sm:$0xf]
  %v209 = vld [vmem:[%s7 + $0x18] sm:$0xf]
  %v210 = vld [vmem:[%s7 + $0x1c] sm:$0xf]
  %v211 = vld [vmem:[%s8] sm:$0x1]
  %v213 = vlaneseq
  %v214 = vshrl.u32 %v213, 7
  %v215 = vsub.s32 0, %v214
  %v216 = vrot.slane %v211, %v215
  %v226 = vunpack.c.l.b16 %v203
  %v227 = vunpack.c.l.b16 %v204
  %v228 = vunpack.c.l.b16 %v205
  %v229 = vunpack.c.l.b16 %v206
  %v230 = vunpack.c.l.b16 %v207
  %v231 = vunpack.c.l.b16 %v208
  %v232 = vunpack.c.l.b16 %v209
  %v233 = vunpack.c.l.b16 %v210
  %v234 = vpack.c.b16 %v227, %v226
  %v235 = vpack.c.b16 %v229, %v228
  %v236 = vpack.c.b16 %v231, %v230
  %v237 = vpack.c.b16 %v233, %v232
  %vm242 = vcmask 523264
  %v244 = vsel %vm242, %v202, 0
  %246 = vmatprep.subr.bf16.mxu0 0
  %247 = vmatpush1.bf16.msra.mxu0 0
  %248 = vmatprep.subr.bf16.mxu0 0
  %249 = vmatpush1.bf16.msra.mxu0 0
  %250 = vmatprep.subr.bf16.mxu0 0
  %251 = vmatpush1.bf16.msra.mxu0 0
  %252 = vmatprep.subr.bf16.mxu0 0
  %253 = vmatpush1.bf16.msra.mxu0 0
  %254 = vmatprep.subr.bf16.mxu0 0
  %255 = vmatpush1.bf16.msra.mxu0 %v237
  %256 = vmatprep.subr.bf16.mxu0 0
  %257 = vmatpush1.bf16.msra.mxu0 %v236
  %258 = vmatprep.subr.bf16.mxu0 0
  %259 = vmatpush1.bf16.msra.mxu0 %v235
  %260 = vmatprep.subr.bf16.mxu0 0
  %261 = vmatpush1.bf16.msra.mxu0 %v234
  %262 = vmatprep.subr.bf16.mxu0 0
  %263 = vmatpush2.bf16.msra.mxu0 0
  %264 = vmatprep.subr.bf16.mxu0 0
  %265 = vmatpush2.bf16.msra.mxu0 0
  %266 = vmatprep.subr.bf16.mxu0 0
  %267 = vmatpush2.bf16.msra.mxu0 0
  %268 = vmatprep.subr.bf16.mxu0 0
  %269 = vmatpush2.bf16.msra.mxu0 0
  %270 = vmatprep.subr.bf16.mxu0 0
  %271 = vmatpush2.bf16.msra.mxu0 0
  %272 = vmatprep.subr.bf16.mxu0 0
  %273 = vmatpush2.bf16.msra.mxu0 0
  %274 = vmatprep.subr.bf16.mxu0 0
  %275 = vmatpush2.bf16.msra.mxu0 0
  %276 = vmatprep.subr.bf16.mxu0 0
  %277 = vmatpush2.bf16.msra.mxu0 0
  %278 = vmatprep.mubr.bf16.mxu0 0
  %279 = vmatmul.mubr.bf16.gmra.mxu0 %v244
  %v280 = vpop.f32.mrf.mxu0
  %v281 = vadd.f32 %v216, %v280
  %v282 = vpop.f32.mrf.mxu0
  %v283 = vpop.f32.mrf.mxu0
  %v284 = vpop.f32.mrf.mxu0
  %285 = vdwg.mxu0
  %v286 = vmax.f32 %v281, 0.0
  %v287 = vpack.c.bf16 %v286, %v286
  %v288 = vld [vmem:[%s9] sm:$0xf]
  %v289 = vld [vmem:[%s9 + $0x4] sm:$0xf]
  %v290 = vld [vmem:[%s9 + $0x8] sm:$0xf]
  %v291 = vld [vmem:[%s9 + $0xc] sm:$0xf]
  %v292 = vld [vmem:[%s9 + $0x10] sm:$0xf]
  %v293 = vld [vmem:[%s9 + $0x14] sm:$0xf]
  %v294 = vld [vmem:[%s9 + $0x18] sm:$0xf]
  %v295 = vld [vmem:[%s9 + $0x1c] sm:$0xf]
  %v296 = vld [vmem:[%s10] sm:$0x1]
  %v298 = vlaneseq
  %v299 = vshrl.u32 %v298, 7
  %v300 = vsub.s32 0, %v299
  %v301 = vrot.slane %v296, %v300
  %v311 = vunpack.c.l.b16 %v288
  %v312 = vunpack.c.l.b16 %v289
  %v313 = vunpack.c.l.b16 %v290
  %v314 = vunpack.c.l.b16 %v291
  %v315 = vunpack.c.l.b16 %v292
  %v316 = vunpack.c.l.b16 %v293
  %v317 = vunpack.c.l.b16 %v294
  %v318 = vunpack.c.l.b16 %v295
  %v319 = vpack.c.b16 %v312, %v311
  %v320 = vpack.c.b16 %v314, %v313
  %v321 = vpack.c.b16 %v316, %v315
  %v322 = vpack.c.b16 %v318, %v317
  %v328 = vsel %vm242, %v287, 0
  %330 = vmatprep.subr.bf16.mxu0 0
  %331 = vmatpush1.bf16.msra.mxu0 0
  %332 = vmatprep.subr.bf16.mxu0 0
  %333 = vmatpush1.bf16.msra.mxu0 0
  %334 = vmatprep.subr.bf16.mxu0 0
  %335 = vmatpush1.bf16.msra.mxu0 0
  %336 = vmatprep.subr.bf16.mxu0 0
  %337 = vmatpush1.bf16.msra.mxu0 0
  %338 = vmatprep.subr.bf16.mxu0 0
  %339 = vmatpush1.bf16.msra.mxu0 %v322
  %340 = vmatprep.subr.bf16.mxu0 0
  %341 = vmatpush1.bf16.msra.mxu0 %v321
  %342 = vmatprep.subr.bf16.mxu0 0
  %343 = vmatpush1.bf16.msra.mxu0 %v320
  %344 = vmatprep.subr.bf16.mxu0 0
  %345 = vmatpush1.bf16.msra.mxu0 %v319
  %346 = vmatprep.subr.bf16.mxu0 0
  %347 = vmatpush2.bf16.msra.mxu0 0
  %348 = vmatprep.subr.bf16.mxu0 0
  %349 = vmatpush2.bf16.msra.mxu0 0
  %350 = vmatprep.subr.bf16.mxu0 0
  %351 = vmatpush2.bf16.msra.mxu0 0
  %352 = vmatprep.subr.bf16.mxu0 0
  %353 = vmatpush2.bf16.msra.mxu0 0
  %354 = vmatprep.subr.bf16.mxu0 0
  %355 = vmatpush2.bf16.msra.mxu0 0
  %356 = vmatprep.subr.bf16.mxu0 0
  %357 = vmatpush2.bf16.msra.mxu0 0
  %358 = vmatprep.subr.bf16.mxu0 0
  %359 = vmatpush2.bf16.msra.mxu0 0
  %360 = vmatprep.subr.bf16.mxu0 0
  %361 = vmatpush2.bf16.msra.mxu0 0
  %362 = vmatprep.mubr.bf16.mxu0 0
  %363 = vmatmul.mubr.bf16.gmra.mxu0 %v328
  %v364 = vpop.f32.mrf.mxu0
  %v365 = vadd.f32 %v301, %v364
  %v366 = vpop.f32.mrf.mxu0
  %v367 = vpop.f32.mrf.mxu0
  %v368 = vpop.f32.mrf.mxu0
  %369 = vdwg.mxu0
  %370 = vst.msk [vmem:[%s11] sm:$0xff] %vm47, %v365
  // Predicated region
  $region46: #{critic_forward.1} parent=0 // pred_check
    _
  $region47: #{critic_forward.1} parent=0 // pred_check_branch
    %372 = sbr.rel (0) target = $region49
  $region48: #{critic_forward.1} parent=0 // pred_region
    _
  $region49: #{critic_forward.1} parent=0 // pred_fallthru
    _
  // Predicated region
  $region50: #{critic_forward.1} parent=0 // pred_check
    _
  $region51: #{critic_forward.1} parent=0 // pred_check_branch
    %374 = sbr.rel (0) target = $region53
  $region52: #{critic_forward.1} parent=0 // pred_region
    _
  $region53: #{critic_forward.1} parent=0 // pred_fallthru
    _

</llo_original>
